<compile_context>
chip_gen: v6e
topology: v6e:2x2x1
jax: 0.10.0
libtpu: 0.0.40
codegen_flags: <defaults>
</compile_context>

<pallas_src>
import functools
import math

import jax
import jax.numpy as jnp
from jax.experimental import pallas as pl
from jax.experimental.pallas import tpu as pltpu

D_MODEL = 32
MAX_LEN = 64          # module default is 5000; same semantics (pe[:S])
P_DROP = 0.1
_ROW_TILE = 512       # max seq-rows per grid step (multiple of 8)


def make_pe(d_model: int, max_len: int) -> jnp.ndarray:
    """Deterministic positional-encoding buffer, identical to the torch code."""
    position = jnp.arange(max_len, dtype=jnp.float32)[:, None]            # [L, 1]
    div_term = jnp.exp(jnp.arange(0, d_model, 2, dtype=jnp.float32)
                       * (-math.log(10000.0) / d_model))                  # [D/2]
    pe = jnp.zeros((max_len, 1, d_model), dtype=jnp.float32)
    pe = pe.at[:, 0, 0::2].set(jnp.sin(position * div_term))
    pe = pe.at[:, 0, 1::2].set(jnp.cos(position * div_term))
    return pe


def _pe_add_kernel(x_ref, pe_ref, o_ref, *, n_rep):
    # x_ref: [TS, B*D]   pe_ref: [TS, D]
    pe_row = jnp.tile(pe_ref[...], (1, n_rep))                 # [TS, B*D]
    o_ref[...] = (x_ref[...] + pe_row).astype(o_ref.dtype)


def _pe_add_dropout_kernel(x_ref, pe_ref, bits_ref, o_ref, *, n_rep, thr31, scale):
    # x_ref/bits_ref/o_ref: [TS, B*D]   pe_ref: [TS, D]
    pe_row = jnp.tile(pe_ref[...], (1, n_rep))
    y = x_ref[...] + pe_row
    # 31 uniform random bits per element; drop iff bits < thr31 (integer compare,
    # no int->float cast or multiply in the hot path).
    r = jax.lax.bitwise_and(bits_ref[...], jnp.int32(0x7FFFFFFF))
    keep = r >= jnp.int32(thr31)
    o_ref[...] = jnp.where(keep, y * scale, 0.0).astype(o_ref.dtype)


def positional_encoding(x, pe, *, key=None, p_drop=P_DROP, training=True):
    """x: [S, B, D] float32.  Returns dropout(x + pe[:S]) with inverted scaling."""
    S, B, D = x.shape
    BD = B * D
    x2 = x.reshape(S, BD)            # free view: lane axis becomes B*D
    pe2 = pe[:S].reshape(S, D)       # B-fold smaller than x

    # Row-tile: 8-aligned, capped both by _ROW_TILE and by ~2 MiB per block so
    # double-buffered x/bits/out streams fit v7x's smaller VMEM without tuning.
    max_rows_by_vmem = max(8, ((2 * 1024 * 1024) // (BD * 4)) // 8 * 8)
    ts = min(_ROW_TILE, max_rows_by_vmem)
    ts = S if S <= ts else ts
    grid = (pl.cdiv(S, ts),)

    x_spec = pl.BlockSpec((ts, BD), lambda i: (i, 0))
    pe_spec = pl.BlockSpec((ts, D), lambda i: (i, 0))
    out_spec = pl.BlockSpec((ts, BD), lambda i: (i, 0))
    out_shape = jax.ShapeDtypeStruct((S, BD), x.dtype)

    nbytes = x2.size * x2.dtype.itemsize
    compiler_params = pltpu.CompilerParams(dimension_semantics=("parallel",))

    if (not training) or p_drop == 0.0:
        cost = pl.CostEstimate(flops=S * BD, transcendentals=0,
                               bytes_accessed=2 * nbytes + pe2.size * 4)
        out2 = pl.pallas_call(
            functools.partial(_pe_add_kernel, n_rep=B),
            out_shape=out_shape,
            grid=grid,
            in_specs=[x_spec, pe_spec],
            out_specs=out_spec,
            compiler_params=compiler_params,
            cost_estimate=cost,
        )(x2, pe2)
        return out2.reshape(S, B, D)

    if key is None:
        key = jax.random.PRNGKey(0)
    bits = jax.lax.bitcast_convert_type(
        jax.random.bits(key, (S, BD), dtype=jnp.uint32), jnp.int32)

    thr31 = int(round(p_drop * float(1 << 31)))
    scale = 1.0 / (1.0 - p_drop)
    cost = pl.CostEstimate(flops=4 * S * BD, transcendentals=0,
                           bytes_accessed=3 * nbytes + pe2.size * 4)
    out2 = pl.pallas_call(
        functools.partial(_pe_add_dropout_kernel, n_rep=B, thr31=thr31, scale=scale),
        out_shape=out_shape,
        grid=grid,
        in_specs=[x_spec, pe_spec, x_spec],     # bits shares x's tiling
        out_specs=out_spec,
        compiler_params=compiler_params,
        cost_estimate=cost,
    )(x2, pe2, bits)
    return out2.reshape(S, B, D)


if __name__ == "__main__":
    key = jax.random.PRNGKey(0)
    S, B, D = 8, 2, D_MODEL                     # seq=8, batch=2, hidden=32
    x = jax.random.normal(key, (S, B, D), dtype=jnp.float32)
    pe = make_pe(D_MODEL, MAX_LEN)

    ref = x + pe[:S]                            # broadcast over batch

    # 1) eval-mode (deterministic) path: exact x + pe[:S].
    out_eval = jax.block_until_ready(positional_encoding(x, pe, training=False))
    assert out_eval.shape == (S, B, D)
    assert jnp.allclose(out_eval, ref, atol=1e-6), "eval-mode mismatch"

    # 2) training-mode path: dropout via integer-threshold compare on random bits.
    out_train = jax.block_until_ready(
        positional_encoding(x, pe, key=jax.random.PRNGKey(1234), training=True))
    assert out_train.shape == (S, B, D)
    scaled = ref / (1.0 - P_DROP)
    ok = jnp.logical_or(jnp.isclose(out_train, 0.0, atol=1e-6),
                        jnp.isclose(out_train, scaled, atol=1e-5))
    assert bool(jnp.all(ok)), "training-mode dropout values inconsistent"

    print("KERNEL_OK")
</pallas_src>

<mosaic_0001>
module attributes {stable_mosaic.version = 11 : i64} {
  func.func @_pe_add_kernel(%arg0: i32, %arg1: memref<8x64xf32, #tpu.memory_space<vmem>>, %arg2: memref<8x32xf32, #tpu.memory_space<vmem>>, %arg3: memref<8x64xf32, #tpu.memory_space<vmem>>) attributes {dimension_semantics = [#tpu.dimension_semantics<parallel>], iteration_bounds = array<i64: 1>, scalar_prefetch = 0 : i64, scratch_operands = 0 : i64, tpu.core_type = #tpu.core_type<tc>, window_params = [{transform_indices = @transform_0, window_bounds = array<i64: 8, 64>}, {transform_indices = @transform_1, window_bounds = array<i64: 8, 32>}, {transform_indices = @transform_2, window_bounds = array<i64: 8, 64>}]} {
    %c0 = arith.constant 0 : index
    %c0_0 = arith.constant 0 : index
    %0 = vector.load %arg2[%c0, %c0_0] : memref<8x32xf32, #tpu.memory_space<vmem>>, vector<8x32xf32>
    %1 = tpu.concatenate %0, %0 in 1 : vector<8x32xf32>, vector<8x32xf32> -> vector<8x64xf32>
    %c0_1 = arith.constant 0 : index
    %c0_2 = arith.constant 0 : index
    %2 = vector.load %arg1[%c0_1, %c0_2] : memref<8x64xf32, #tpu.memory_space<vmem>>, vector<8x64xf32>
    %3 = arith.addf %2, %1 : vector<8x64xf32>
    %c0_3 = arith.constant 0 : index
    %c0_4 = arith.constant 0 : index
    %4 = vector.load %arg3[%c0_3, %c0_4] : memref<8x64xf32, #tpu.memory_space<vmem>>, vector<8x64xf32>
    tpu.vector_store %arg3[%c0_3, %c0_4], %3 {strides = array<i32>} : memref<8x64xf32, #tpu.memory_space<vmem>>, vector<8x64xf32>,
    return
  }
  func.func @transform_0(%arg0: i32) -> (i32, i32) {
    %c0_i32 = arith.constant 0 : i32
    %c0_i32_0 = arith.constant 0 : i32
    return %arg0, %c0_i32 : i32, i32
  }
  func.func @transform_1(%arg0: i32) -> (i32, i32) {
    %c0_i32 = arith.constant 0 : i32
    %c0_i32_0 = arith.constant 0 : i32
    return %arg0, %c0_i32 : i32, i32
  }
  func.func @transform_2(%arg0: i32) -> (i32, i32) {
    %c0_i32 = arith.constant 0 : i32
    %c0_i32_0 = arith.constant 0 : i32
    return %arg0, %c0_i32 : i32, i32
  }
}

</mosaic_0001>

<llo_original>
// kernel: tpu_custom_call.1
$region0: #{tpu_custom_call.1}
  #allocation0 [shape = 'u32[]', space=smem, size = 0x4, offset = 0x4, fixed_abs, tag = 'smem constant byte address 0x4 - core index']
  #allocation1 [shape = 'u32[144,128]{1,0:T(1,128)}', space=vmem, size = 0x12000, scoped, tag = 'internal scratch']
  %s0 = inlined_call_operand.hbm [shape: f32[8,64], index: 0, kind: input, shape index: {}]
  %s1 = inlined_call_operand.hbm [shape: f32[8,32], index: 1, kind: input, shape index: {}]
  %s2 = inlined_call_operand.hbm [shape: f32[8,64], index: 2, kind: output, shape index: {}]
  %s3 = sld [smem:[#allocation0]]
  $region26: #{tpu_custom_call.1} parent=0
    _
  %s5 = ssub.s32 1, %s3
  %s6 = scalar_select 0, %s5, %s3
  $region1: #{tpu_custom_call.1} parent=0
    #allocation2 [shape = 'u8[4096]{0}', space=vmem, size = 0x1000, scoped, tag = 'input window, operand 0, single buffered']
    #allocation3 [shape = 's32[1]{0}', space=sflag, size = 0x4, scoped, tag = 'scoped memory for tpu_custom_call.1']
    #allocation4 [shape = 's32[1]{0}', space=sflag, size = 0x4, scoped, tag = 'scoped memory for tpu_custom_call.1']
    #allocation5 [shape = 'u8[4096]{0}', space=vmem, size = 0x1000, scoped, tag = 'input window, operand 1, single buffered']
    #allocation6 [shape = 's32[1]{0}', space=sflag, size = 0x4, scoped, tag = 'scoped memory for tpu_custom_call.1']
    #allocation7 [shape = 'u8[4096]{0}', space=vmem, size = 0x1000, scoped, tag = 'output window, operand 0, single buffered']
    %7 = vsyncpa [#allocation3], 0
    %8 = vsyncpa [#allocation6], 0
    %9 = vsyncpa [#allocation4], 0
    // Predicated region
    $region2: #{tpu_custom_call.1} parent=1 // pred_check
      _
    $region3: #{tpu_custom_call.1} parent=1 // pred_check_branch
      %11 = sbr.rel (0) target = $region5
    $region4: #{tpu_custom_call.1} parent=1 // pred_region
      %s13 = ssub.s32 128, 128
      %14 = vsyncadd [#allocation3], %s13
      %s16 = sshll.u32 [#allocation2], 4
      %s17 = int_to_ptr.vmem [resolvable:$true] %s16
      %19 = dma.hbm_to_vmem [thread:$0]  %s0, 128, %s17, [#allocation3]
    $region5: #{tpu_custom_call.1} parent=1 // pred_fallthru
      _
    // Predicated region
    $region6: #{tpu_custom_call.1} parent=1 // pred_check
      _
    $region7: #{tpu_custom_call.1} parent=1 // pred_check_branch
      %21 = sbr.rel (0) target = $region9
    $region8: #{tpu_custom_call.1} parent=1 // pred_region
      %s23 = ssub.s32 128, 128
      %24 = vsyncadd [#allocation6], %s23
      %s26 = sshll.u32 [#allocation5], 4
      %s27 = int_to_ptr.vmem [resolvable:$true] %s26
      %29 = dma.hbm_to_vmem [thread:$0]  %s1, 128, %s27, [#allocation6]
    $region9: #{tpu_custom_call.1} parent=1 // pred_fallthru
      _
    // Predicated region
    $region10: #{tpu_custom_call.1} parent=1 // pred_check
      _
    $region11: #{tpu_custom_call.1} parent=1 // pred_check_branch
      %31 = sbr.rel (0) target = $region13
    $region12: #{tpu_custom_call.1} parent=1 // pred_region
      %32 = dma.done [#allocation3], 128
    $region13: #{tpu_custom_call.1} parent=1 // pred_fallthru
      _
    // Predicated region
    $region14: #{tpu_custom_call.1} parent=1 // pred_check
      _
    $region15: #{tpu_custom_call.1} parent=1 // pred_check_branch
      %34 = sbr.rel (0) target = $region17
    $region16: #{tpu_custom_call.1} parent=1 // pred_region
      %35 = dma.done [#allocation6], 128
    $region17: #{tpu_custom_call.1} parent=1 // pred_fallthru
      _
    %v36 = vld [vmem:[#allocation5] sm:$0xff]
    %38 = vrot.lane.b32.xlu0 %v36, 32
    %v39 = vpop.permute.xlu0 %38
    %vm41 = vcmask 261120
    %v42 = vsel %vm41, %v36, %v39
    %v43 = vld [vmem:[#allocation2] sm:$0xff]
    %v44 = vadd.f32 %v43, %v42
    %vm45 = vcmask 523264
    %46 = vst.msk [vmem:[#allocation7] sm:$0xff] %vm45, %v44
    // Predicated region
    $region18: #{tpu_custom_call.1} parent=1 // pred_check
      _
    $region19: #{tpu_custom_call.1} parent=1 // pred_check_branch
      %48 = sbr.rel (0) target = $region21
    $region20: #{tpu_custom_call.1} parent=1 // pred_region
      %s50 = ssub.s32 128, 128
      %51 = vsyncadd [#allocation4], %s50
      %s53 = sshll.u32 [#allocation7], 4
      %s54 = int_to_ptr.vmem [resolvable:$true] %s53
      %56 = dma.vmem_to_hbm [thread:$0]  %s54, 128, %s2, [#allocation4]
    $region21: #{tpu_custom_call.1} parent=1 // pred_fallthru
      _
    // Predicated region
    $region22: #{tpu_custom_call.1} parent=1 // pred_check
      _
    $region23: #{tpu_custom_call.1} parent=1 // pred_check_branch
      %58 = sbr.rel (0) target = $region25
    $region24: #{tpu_custom_call.1} parent=1 // pred_region
      %59 = dma.done [#allocation4], 128
    $region25: #{tpu_custom_call.1} parent=1 // pred_fallthru
      _
    %60 = vsyncpa [#allocation3], 1
    %61 = vsyncpa [#allocation6], 1
    %62 = vsyncpa [#allocation4], 1

</llo_original>
